<compile_context>
chip_gen: v7x
topology: tpu7x:2x2x1
jax: 0.10.0
libtpu: 0.0.40
codegen_flags: <defaults>
</compile_context>

<pallas_src>
import math

import jax
import jax.numpy as jnp
from jax.experimental import pallas as pl
from jax.experimental.pallas import tpu as pltpu


# -----------------------------------------------------------------------------
# Kernel bodies
# -----------------------------------------------------------------------------
def _add_pe_batched_kernel(x_ref, pe_ref, o_ref):
    # x_ref / o_ref: (B, tS, D); pe_ref: (tS, D) broadcast over batch.
    o_ref[...] = x_ref[...] + pe_ref[...][None]


def _add_pe_kernel(x_ref, pe_ref, o_ref):
    # x_ref / o_ref / pe_ref: (tS, D)  (batch dim squeezed by the BlockSpec).
    o_ref[...] = x_ref[...] + pe_ref[...]


# -----------------------------------------------------------------------------
# Sizing helpers
# -----------------------------------------------------------------------------
def _vmem_limit_bytes():
    """Explicit scoped-VMEM limit with headroom under physical VMEM."""
    try:
        info = pltpu.get_tpu_info()
        cap = getattr(info, "vmem_capacity_bytes", None) or getattr(
            info, "vmem_size_bytes", None
        )
        if cap:
            # 3/4 of physical, capped at 96 MiB (v5e/v6e: 96 MiB, v7x: 48 MiB).
            return int(min(cap * 3 // 4, 96 << 20))
    except Exception:
        pass
    return 48 << 20  # safe on every generation (v7x physical VMEM is 64 MiB)


def _round_tile(tS, S):
    tS = min(int(tS), int(S))
    if tS == S:
        return tS
    return min(int(S), max(8, (tS // 8) * 8))  # (8,128) sublane constraint


def _choose_seq_tile(S, batch_in_block, D, x_itemsize, pe_itemsize, step_bytes):
    """Rows per seq tile so that one grid step (x + out + pe tiles, each
    double-buffered by the pipeline) stays inside the step budget."""
    bytes_per_row = 2 * batch_in_block * D * x_itemsize + D * pe_itemsize
    rows = int(step_bytes // max(1, bytes_per_row))
    return _round_tile(max(rows, 1), S)


def _maybe_fold_lanes(x, pe_s):
    """If d_model < 128, divides 128, and S divides the fold factor, fold k
    consecutive seq rows into one row so the lane dim becomes 128
    (lane-dense vector stores / DMAs).  Pure layout plumbing; elementwise
    mapping of (x + pe) is unchanged."""
    B, S, D = x.shape
    if D >= 128 or D % 128 == 0 or 128 % D != 0:
        return x, pe_s, None
    k = 128 // D
    if S % k != 0:
        return x, pe_s, None
    S2, D2 = S // k, D * k
    return x.reshape(B, S2, D2), pe_s.reshape(S2, D2), (B, S, D)


# -----------------------------------------------------------------------------
# Wrapper
# -----------------------------------------------------------------------------
def add_positional_encoding(x, pe, *, seq_block=None):
    """x: (B, S, D);  pe: (max_len, D) with max_len >= S.  Returns x + pe[:S]."""
    B, S, D = x.shape
    assert pe.shape[-1] == D and pe.shape[-2] >= S

    # Cast + slice pe once in the wrapper (no in-kernel dtype round trip).
    # Note: this rounds the pe table to x.dtype (e.g. bf16) — deliberate.
    pe_s = pe[:S].astype(x.dtype)

    x_k, pe_k, orig_shape = _maybe_fold_lanes(x, pe_s)
    Bk, Sk, Dk = x_k.shape

    x_item = jnp.dtype(x_k.dtype).itemsize
    pe_item = jnp.dtype(pe_k.dtype).itemsize

    vmem_limit = _vmem_limit_bytes()
    # Double-buffered tiles use 2x the per-step bytes; keep that at <= half the
    # scoped limit so the compiler retains headroom for its own scratch.
    step_bytes = vmem_limit // 4

    cost = pl.CostEstimate(
        flops=B * S * D,
        transcendentals=0,
        bytes_accessed=2 * B * S * D * x_item + S * D * pe_item,
    )
    cparams = dict(vmem_limit_bytes=vmem_limit)

    # Can the whole batch be folded into a single block (>=8 seq rows, or the
    # full sequence, per step)?
    folded_rows = step_bytes // max(1, 2 * Bk * Dk * x_item + Dk * pe_item)
    use_batched_block = folded_rows >= min(8, Sk)

    if use_batched_block:
        # ---- Path A: grid over seq tiles only; pe reuse is structural. ----
        if seq_block is not None:
            tS = _round_tile(seq_block, Sk)
        else:
            tS = _choose_seq_tile(Sk, Bk, Dk, x_item, pe_item, step_bytes)
        n_s = pl.cdiv(Sk, tS)
        # Give v7x's two TensorCores something to split when possible.
        if seq_block is None and n_s < 2 and Sk >= 16:
            tS = _round_tile(-(-Sk // 2), Sk)
            n_s = pl.cdiv(Sk, tS)

        out = pl.pallas_call(
            _add_pe_batched_kernel,
            out_shape=jax.ShapeDtypeStruct((Bk, Sk, Dk), x.dtype),
            grid=(n_s,),
            in_specs=[
                pl.BlockSpec((Bk, tS, Dk), lambda s: (0, s, 0)),   # x tile
                pl.BlockSpec((tS, Dk), lambda s: (s, 0)),          # pe tile
            ],
            out_specs=pl.BlockSpec((Bk, tS, Dk), lambda s: (0, s, 0)),
            input_output_aliases={0: 0},
            compiler_params=pltpu.CompilerParams(
                dimension_semantics=("parallel",), **cparams
            ),
            cost_estimate=cost,
        )(x_k, pe_k)
    else:
        # ---- Path B: (seq, batch) grid; batch innermost so the pe tile's
        # block index is unchanged across consecutive steps (not re-DMA'd). ----
        if seq_block is not None:
            tS = _round_tile(seq_block, Sk)
        else:
            tS = _choose_seq_tile(Sk, 1, Dk, x_item, pe_item, step_bytes)
        n_s = pl.cdiv(Sk, tS)
        if seq_block is None and n_s * Bk < 2 and Sk >= 16:
            tS = _round_tile(-(-Sk // 2), Sk)
            n_s = pl.cdiv(Sk, tS)

        out = pl.pallas_call(
            _add_pe_kernel,
            out_shape=jax.ShapeDtypeStruct((Bk, Sk, Dk), x.dtype),
            grid=(n_s, Bk),
            in_specs=[
                pl.BlockSpec((None, tS, Dk), lambda s, b: (b, s, 0)),  # x tile
                pl.BlockSpec((tS, Dk), lambda s, b: (s, 0)),           # pe tile
            ],
            out_specs=pl.BlockSpec((None, tS, Dk), lambda s, b: (b, s, 0)),
            input_output_aliases={0: 0},
            compiler_params=pltpu.CompilerParams(
                dimension_semantics=("parallel", "parallel"), **cparams
            ),
            cost_estimate=cost,
        )(x_k, pe_k)

    if orig_shape is not None:
        out = out.reshape(orig_shape)
    return out


# -----------------------------------------------------------------------------
# Module wrapper (mirrors the PyTorch module)
# -----------------------------------------------------------------------------
class PositionalEncodingPallas:
    """Pallas/TPU port of PositionalEncoding (eval-mode forward)."""

    def __init__(self, d_model, dropout, max_len=5000):
        self.d_model = d_model
        self.dropout_p = dropout   # identity in eval mode (see TODO at top)
        self.max_len = max_len

        # Build the sinusoidal table exactly as the PyTorch __init__ does.
        pos = jnp.arange(max_len, dtype=jnp.float32)[:, None]                    # (L, 1)
        div_term = jnp.exp(
            jnp.arange(0, d_model, 2, dtype=jnp.float32)
            * (-math.log(10000.0) / d_model)
        )                                                                        # (D/2,)
        pe = jnp.zeros((max_len, d_model), jnp.float32)
        pe = pe.at[:, 0::2].set(jnp.sin(pos * div_term))
        pe = pe.at[:, 1::2].set(jnp.cos(pos * div_term))
        self.pe = pe                                                             # (L, D)
        self._pe_cache = {}                                                      # dtype -> cast table

    def _pe_for(self, dtype):
        key = jnp.dtype(dtype).name
        if key not in self._pe_cache:
            self._pe_cache[key] = self.pe.astype(dtype)
        return self._pe_cache[key]

    def __call__(self, x, *, seq_block=None):
        # x: (B, S, d_model) with S <= max_len
        return add_positional_encoding(x, self._pe_for(x.dtype), seq_block=seq_block)


# -----------------------------------------------------------------------------
# Self-test
# -----------------------------------------------------------------------------
if __name__ == "__main__":
    root = jax.random.PRNGKey(0)
    k1, k2, k3 = jax.random.split(root, 3)

    # Test 1: small shape implied by the module (batch=2, seq=8, d_model=32).
    # Exercises the lane-folding path (D=32 -> folded lane dim 128).
    B, S, d_model = 2, 8, 32
    x = jax.random.normal(k1, (B, S, d_model), jnp.float32)
    mod = PositionalEncodingPallas(d_model, dropout=0.1)
    out = jax.block_until_ready(mod(x))
    ref = x + mod.pe[None, :S, :]
    assert out.shape == (B, S, d_model)
    assert jnp.allclose(out, ref, atol=1e-6, rtol=1e-6)

    # Test 2: multi-tile grid with a ragged last seq tile (exercises pipelining
    # and the partial-block path; D=128 so no folding).
    B2, S2, d2 = 2, 160, 128
    x2 = jax.random.normal(k2, (B2, S2, d2), jnp.float32)
    mod2 = PositionalEncodingPallas(d2, dropout=0.0, max_len=512)
    out2 = jax.block_until_ready(mod2(x2, seq_block=64))
    ref2 = x2 + mod2.pe[None, :S2, :]
    assert out2.shape == (B2, S2, d2)
    assert jnp.allclose(out2, ref2, atol=1e-6, rtol=1e-6)

    # Test 3: bf16 input — pe is cast to bf16 once in the wrapper; kernel adds
    # natively in bf16 (no f32 round trip).
    B3, S3, d3 = 4, 64, 256
    x3 = jax.random.normal(k3, (B3, S3, d3), jnp.float32).astype(jnp.bfloat16)
    mod3 = PositionalEncodingPallas(d3, dropout=0.0, max_len=256)
    out3 = jax.block_until_ready(mod3(x3))
    ref3 = x3 + mod3.pe[None, :S3, :].astype(jnp.bfloat16)
    assert out3.shape == (B3, S3, d3)
    assert jnp.allclose(out3.astype(jnp.float32), ref3.astype(jnp.float32),
                        atol=1e-2, rtol=1e-2)

    print("KERNEL_OK")
</pallas_src>

<mosaic_0001>
module attributes {stable_mosaic.version = 11 : i64} {
  func.func @_add_pe_batched_kernel(%arg0: i32, %arg1: memref<2x2x128xf32, #tpu.memory_space<vmem>>, %arg2: memref<2x128xf32, #tpu.memory_space<vmem>>, %arg3: memref<2x2x128xf32, #tpu.memory_space<vmem>>) attributes {dimension_semantics = [#tpu.dimension_semantics<parallel>], iteration_bounds = array<i64: 1>, scalar_prefetch = 0 : i64, scratch_operands = 0 : i64, tpu.core_type = #tpu.core_type<tc>, window_params = [{transform_indices = @transform_0, window_bounds = array<i64: 2, 2, 128>}, {transform_indices = @transform_1, window_bounds = array<i64: 2, 128>}, {transform_indices = @transform_2, window_bounds = array<i64: 2, 2, 128>}]} {
    %c0 = arith.constant 0 : index
    %c0_0 = arith.constant 0 : index
    %c0_1 = arith.constant 0 : index
    %0 = vector.load %arg1[%c0, %c0_0, %c0_1] : memref<2x2x128xf32, #tpu.memory_space<vmem>>, vector<2x2x128xf32>
    %c0_2 = arith.constant 0 : index
    %c0_3 = arith.constant 0 : index
    %1 = vector.load %arg2[%c0_2, %c0_3] : memref<2x128xf32, #tpu.memory_space<vmem>>, vector<2x128xf32>
    %2 = vector.shape_cast %1 : vector<2x128xf32> to vector<1x2x128xf32>
    %3 = vector.broadcast %2 : vector<1x2x128xf32> to vector<2x2x128xf32>
    %4 = arith.addf %0, %3 : vector<2x2x128xf32>
    %c0_4 = arith.constant 0 : index
    %c0_5 = arith.constant 0 : index
    %c0_6 = arith.constant 0 : index
    %5 = vector.load %arg3[%c0_4, %c0_5, %c0_6] : memref<2x2x128xf32, #tpu.memory_space<vmem>>, vector<2x2x128xf32>
    tpu.vector_store %arg3[%c0_4, %c0_5, %c0_6], %4 {strides = array<i32>} : memref<2x2x128xf32, #tpu.memory_space<vmem>>, vector<2x2x128xf32>,
    return
  }
  func.func @transform_0(%arg0: i32) -> (i32, i32, i32) {
    %c0_i32 = arith.constant 0 : i32
    %c0_i32_0 = arith.constant 0 : i32
    %c0_i32_1 = arith.constant 0 : i32
    return %c0_i32, %arg0, %c0_i32_0 : i32, i32, i32
  }
  func.func @transform_1(%arg0: i32) -> (i32, i32) {
    %c0_i32 = arith.constant 0 : i32
    %c0_i32_0 = arith.constant 0 : i32
    return %arg0, %c0_i32 : i32, i32
  }
  func.func @transform_2(%arg0: i32) -> (i32, i32, i32) {
    %c0_i32 = arith.constant 0 : i32
    %c0_i32_0 = arith.constant 0 : i32
    %c0_i32_1 = arith.constant 0 : i32
    return %c0_i32, %arg0, %c0_i32_0 : i32, i32, i32
  }
}

</mosaic_0001>

<llo_original>
// kernel: tpu_custom_call.1
$region0: #{tpu_custom_call.1}
  #allocation0 [shape = 'u32[]', space=smem, size = 0x4, offset = 0x4, fixed_abs, tag = 'smem constant byte address 0x4 - core index']
  #allocation1 [shape = 'u32[144,128]{1,0:T(1,128)}', space=vmem, size = 0x12000, scoped, tag = 'internal scratch']
  %s0 = inlined_call_operand.hbm [shape: f32[2,2,128], index: 0, kind: input, shape index: {}, may-alias: {0,2}]
  %s1 = inlined_call_operand.vmem [shape: f32[2,128], index: 1, kind: input, shape index: {}]
  %s2 = inlined_call_operand.hbm [shape: f32[2,2,128], index: 2, kind: output, shape index: {}, may-alias: {0,2}]
  %s3 = sld [smem:[#allocation0]]
  $region22: #{tpu_custom_call.1} parent=0
    _
  %s5 = ssub.s32 1, %s3
  %s6 = scalar_select 0, %s5, %s3
  $region1: #{tpu_custom_call.1} parent=0
    #allocation2 [shape = 'u8[2048]{0}', space=vmem, size = 0x800, scoped, tag = 'input window, operand 0, single buffered']
    #allocation3 [shape = 's32[1]{0}', space=sflag, size = 0x4, scoped, tag = 'scoped memory for tpu_custom_call.1']
    #allocation4 [shape = 's32[1]{0}', space=sflag, size = 0x4, scoped, tag = 'scoped memory for tpu_custom_call.1']
    #allocation5 [shape = 'u8[2048]{0}', space=vmem, size = 0x800, scoped, tag = 'output window, operand 0, single buffered']
    %7 = vsyncpa [#allocation3], 0
    %8 = vsyncpa [#allocation4], 0
    // Predicated region
    $region2: #{tpu_custom_call.1} parent=1 // pred_check
      _
    $region3: #{tpu_custom_call.1} parent=1 // pred_check_branch
      %10 = sbr.rel (0) target = $region5
    $region4: #{tpu_custom_call.1} parent=1 // pred_region
      %s12 = ssub.s32 64, 64
      %13 = vsyncadd [#allocation3], %s12
      %s14 = sshll.u32 [#allocation2], 4
      %s15 = int_to_ptr.vmem [resolvable:$true] %s14
      %20 = dma.hbm_to_vmem [thread:$0]  %s0, 64, %s15, [#allocation3], 32, 32, 2
    $region5: #{tpu_custom_call.1} parent=1 // pred_fallthru
      _
    // Predicated region
    $region6: #{tpu_custom_call.1} parent=1 // pred_check
      _
    $region7: #{tpu_custom_call.1} parent=1 // pred_check_branch
      %22 = sbr.rel (0) target = $region9
    $region8: #{tpu_custom_call.1} parent=1 // pred_region
      _
    $region9: #{tpu_custom_call.1} parent=1 // pred_fallthru
      _
    // Predicated region
    $region10: #{tpu_custom_call.1} parent=1 // pred_check
      _
    $region11: #{tpu_custom_call.1} parent=1 // pred_check_branch
      %24 = sbr.rel (0) target = $region13
    $region12: #{tpu_custom_call.1} parent=1 // pred_region
      %25 = dma.done [#allocation3], 64
    $region13: #{tpu_custom_call.1} parent=1 // pred_fallthru
      _
    %v26 = vld [vmem:[#allocation2] sm:$0x3]
    %v27 = vld [vmem:[#allocation2 + $0x2] sm:$0x3]
    %v28 = vld [vmem:[%s1] sm:$0x3]
    %v29 = vadd.f32 %v26, %v28
    %v30 = vadd.f32 %v27, %v28
    %31 = vst [vmem:[#allocation5] sm:$0x3] %v29
    %32 = vst [vmem:[#allocation5 + $0x2] sm:$0x3] %v30
    // Predicated region
    $region14: #{tpu_custom_call.1} parent=1 // pred_check
      _
    $region15: #{tpu_custom_call.1} parent=1 // pred_check_branch
      %34 = sbr.rel (0) target = $region17
    $region16: #{tpu_custom_call.1} parent=1 // pred_region
      %s36 = ssub.s32 64, 64
      %37 = vsyncadd [#allocation4], %s36
      %s38 = sshll.u32 [#allocation5], 4
      %s39 = int_to_ptr.vmem [resolvable:$true] %s38
      %44 = dma.vmem_to_hbm [thread:$0]  %s39, 64, %s2, [#allocation4], 32, 32, 2
    $region17: #{tpu_custom_call.1} parent=1 // pred_fallthru
      _
    // Predicated region
    $region18: #{tpu_custom_call.1} parent=1 // pred_check
      _
    $region19: #{tpu_custom_call.1} parent=1 // pred_check_branch
      %46 = sbr.rel (0) target = $region21
    $region20: #{tpu_custom_call.1} parent=1 // pred_region
      %47 = dma.done [#allocation4], 64
    $region21: #{tpu_custom_call.1} parent=1 // pred_fallthru
      _
    %48 = vsyncpa [#allocation3], 1
    %49 = vsyncpa [#allocation4], 1

</llo_original>
